<compile_context>
chip_gen: v6e
topology: v6e:2x2x1
jax: 0.10.0
libtpu: 0.0.40
codegen_flags: <defaults>
</compile_context>

<pallas_src>
import jax
import jax.numpy as jnp
from jax.experimental import pallas as pl
from jax.experimental.pallas import tpu as pltpu

LANE = 128          # vreg lane width
BF16_ROWS = 16      # bf16 packs 16 rows per vreg (sublane packing)


def _round_up(n, m):
    return (n + m - 1) // m * m


def qnet_kernel(x_ref, w1_ref, b1_ref, w2_ref, b2_ref, w3_ref, b3_ref, o_ref):
    # fc1 + relu : bf16 operands on the MXU, f32 accumulate, f32 epilogue.
    x = x_ref[...].astype(jnp.bfloat16)          # f32 -> bf16 cast (VPU)
    h1 = jnp.dot(x, w1_ref[...], preferred_element_type=jnp.float32)
    h1 = jnp.maximum(h1 + b1_ref[...], 0.0).astype(jnp.bfloat16)
    # fc2 + relu
    h2 = jnp.dot(h1, w2_ref[...], preferred_element_type=jnp.float32)
    h2 = jnp.maximum(h2 + b2_ref[...], 0.0).astype(jnp.bfloat16)
    # fc3 (no activation) -> narrow (tb, action_size) f32 output block.
    out = jnp.dot(h2, w3_ref[...], preferred_element_type=jnp.float32)
    o_ref[...] = (out + b3_ref[...]).astype(o_ref.dtype)


def qnetwork_forward(x, params, action_size, *, tile_b=2048):
    """x: (B, state_size) float32.  Returns (B, action_size) float32."""
    w1, b1, w2, b2, w3, b3 = (params[k] for k in ("w1", "b1", "w2", "b2", "w3", "b3"))
    B, state_size = x.shape
    assert state_size == w1.shape[0]
    h1_pad = w1.shape[1]
    h2_pad = w2.shape[1]
    out_features = w3.shape[1]
    assert out_features == action_size

    # Tiny batches: pad rows up to one packed bf16 tile (16 rows) so the block
    # never exceeds the array; this is the only wrapper-side copy that remains.
    if B < BF16_ROWS:
        x = jnp.pad(x, ((0, BF16_ROWS - B), (0, 0)))
    b_rows = x.shape[0]

    # Batch tile: multiple of 16, capped at tile_b, and capped at ~ceil(rows/2)
    # so there are >= 2 grid steps when possible (v7x megacore sharding).
    b16 = _round_up(b_rows, BF16_ROWS)
    tb = max(BF16_ROWS, min(tile_b, b16))
    if b16 >= 2 * BF16_ROWS:
        tb = min(tb, _round_up((b16 + 1) // 2, BF16_ROWS))
    grid = (pl.cdiv(b_rows, tb),)          # partial last block masked by Pallas

    const = lambda i: (0, 0)   # weights/biases resident in VMEM across grid steps
    out = pl.pallas_call(
        qnet_kernel,
        out_shape=jax.ShapeDtypeStruct((b_rows, out_features), jnp.float32),
        grid=grid,
        in_specs=[
            pl.BlockSpec((tb, state_size), lambda i: (i, 0)),   # x, unpadded lanes
            pl.BlockSpec((state_size, h1_pad), const),          # w1 (unpadded K)
            pl.BlockSpec((1, h1_pad), const),                   # b1
            pl.BlockSpec((h1_pad, h2_pad), const),              # w2
            pl.BlockSpec((1, h2_pad), const),                   # b2
            pl.BlockSpec((h2_pad, out_features), const),        # w3 (unpadded N)
            pl.BlockSpec((1, out_features), const),             # b3
        ],
        out_specs=pl.BlockSpec((tb, out_features), lambda i: (i, 0)),
        compiler_params=pltpu.CompilerParams(
            dimension_semantics=("parallel",),
        ),
    )(x, w1, b1, w2, b2, w3, b3)
    return out if b_rows == B else out[:B]


def init_params(key, state_size, action_size, fc1=32, fc2=64):
    """PyTorch-Linear-style init U(-1/sqrt(fan_in), 1/sqrt(fan_in)).

    Weights are stored (in_features, out_features) in bf16.  Hidden dims are
    zero-padded to 128 once here; the input contraction dim (state_size) and
    the output dim (action_size) are left UNPADDED so x and the result move
    through HBM at their natural sizes.  Biases stay f32 (f32 epilogue)."""
    def linear(k, fan_in, fan_out, fan_in_pad, fan_out_pad):
        kw, kb = jax.random.split(k)
        bound = 1.0 / jnp.sqrt(jnp.float32(fan_in))
        w = jax.random.uniform(kw, (fan_in, fan_out), jnp.float32, -bound, bound)
        b = jax.random.uniform(kb, (1, fan_out), jnp.float32, -bound, bound)
        w_p = jnp.zeros((fan_in_pad, fan_out_pad), jnp.float32)
        w_p = w_p.at[:fan_in, :fan_out].set(w)
        b_p = jnp.zeros((1, fan_out_pad), jnp.float32).at[:, :fan_out].set(b)
        return w_p.astype(jnp.bfloat16), b_p

    f1 = _round_up(fc1, LANE)
    f2 = _round_up(fc2, LANE)

    k1, k2, k3 = jax.random.split(key, 3)
    w1, b1 = linear(k1, state_size, fc1, state_size, f1)   # K unpadded
    w2, b2 = linear(k2, fc1, fc2, f1, f2)
    w3, b3 = linear(k3, fc2, action_size, f2, action_size)  # N unpadded
    return {"w1": w1, "b1": b1, "w2": w2, "b2": b2, "w3": w3, "b3": b3}


def reference_forward(x, p):
    """Pure-JAX reference matching the kernel's numerics (bf16 dots, f32 accum)."""
    h1 = jnp.dot(x.astype(jnp.bfloat16), p["w1"],
                 preferred_element_type=jnp.float32) + p["b1"]
    h1 = jnp.maximum(h1, 0.0).astype(jnp.bfloat16)
    h2 = jnp.dot(h1, p["w2"], preferred_element_type=jnp.float32) + p["b2"]
    h2 = jnp.maximum(h2, 0.0).astype(jnp.bfloat16)
    return jnp.dot(h2, p["w3"], preferred_element_type=jnp.float32) + p["b3"]


if __name__ == "__main__":
    key = jax.random.PRNGKey(0)
    k_x, k_x2, k_p = jax.random.split(key, 3)

    state_size, action_size = 8, 4
    params = init_params(k_p, state_size, action_size, fc1=32, fc2=64)

    # Small batch (single-env style): exercises the B < 16 row-pad path.
    x = jax.random.normal(k_x, (8, state_size), jnp.float32)
    out = jax.block_until_ready(qnetwork_forward(x, params, action_size))
    ref = reference_forward(x, params)
    assert out.shape == (8, action_size)
    assert jnp.allclose(out, ref, atol=1e-4, rtol=1e-4)

    # Batch not a multiple of the tile: grid = cdiv(50, 32) = 2, partial last
    # block (rows 50..63 are masked on the output write).
    x2 = jax.random.normal(k_x2, (50, state_size), jnp.float32)
    out2 = jax.block_until_ready(qnetwork_forward(x2, params, action_size))
    ref2 = reference_forward(x2, params)
    assert out2.shape == (50, action_size)
    assert jnp.allclose(out2, ref2, atol=1e-4, rtol=1e-4)

    print("KERNEL_OK")
</pallas_src>

<mosaic_0001>
module attributes {stable_mosaic.version = 11 : i64} {
  func.func @qnet_kernel(%arg0: i32, %arg1: memref<16x8xf32, #tpu.memory_space<vmem>>, %arg2: memref<8x128xbf16, #tpu.memory_space<vmem>>, %arg3: memref<1x128xf32, #tpu.memory_space<vmem>>, %arg4: memref<128x128xbf16, #tpu.memory_space<vmem>>, %arg5: memref<1x128xf32, #tpu.memory_space<vmem>>, %arg6: memref<128x4xbf16, #tpu.memory_space<vmem>>, %arg7: memref<1x4xf32, #tpu.memory_space<vmem>>, %arg8: memref<16x4xf32, #tpu.memory_space<vmem>>) attributes {dimension_semantics = [#tpu.dimension_semantics<parallel>], iteration_bounds = array<i64: 1>, scalar_prefetch = 0 : i64, scratch_operands = 0 : i64, tpu.core_type = #tpu.core_type<tc>, window_params = [{transform_indices = @transform_0, window_bounds = array<i64: 16, 8>}, {pipeline_mode = #tpu.pipeline_mode<synchronous>, transform_indices = @transform_1, window_bounds = array<i64: 8, 128>}, {pipeline_mode = #tpu.pipeline_mode<synchronous>, transform_indices = @transform_2, window_bounds = array<i64: 1, 128>}, {pipeline_mode = #tpu.pipeline_mode<synchronous>, transform_indices = @transform_3, window_bounds = array<i64: 128, 128>}, {pipeline_mode = #tpu.pipeline_mode<synchronous>, transform_indices = @transform_4, window_bounds = array<i64: 1, 128>}, {pipeline_mode = #tpu.pipeline_mode<synchronous>, transform_indices = @transform_5, window_bounds = array<i64: 128, 4>}, {pipeline_mode = #tpu.pipeline_mode<synchronous>, transform_indices = @transform_6, window_bounds = array<i64: 1, 4>}, {transform_indices = @transform_7, window_bounds = array<i64: 16, 4>}]} {
    %c0 = arith.constant 0 : index
    %c0_0 = arith.constant 0 : index
    %0 = vector.load %arg1[%c0, %c0_0] : memref<16x8xf32, #tpu.memory_space<vmem>>, vector<16x8xf32>
    %1 = arith.truncf %0 : vector<16x8xf32> to vector<16x8xbf16>
    %c0_1 = arith.constant 0 : index
    %c0_2 = arith.constant 0 : index
    %2 = vector.load %arg2[%c0_1, %c0_2] : memref<8x128xbf16, #tpu.memory_space<vmem>>, vector<8x128xbf16>
    %cst = arith.constant dense<0.000000e+00> : vector<16x128xf32>
    %3 = tpu.matmul %1, %2, %cst {dimension_numbers = #tpu.dot_dimension_numbers<[1], [0], [0], [1], [0, 0, 1, 1], [], []>} : vector<16x8xbf16>, vector<8x128xbf16>, vector<16x128xf32> -> vector<16x128xf32>
    %c0_3 = arith.constant 0 : index
    %c0_4 = arith.constant 0 : index
    %4 = vector.load %arg3[%c0_3, %c0_4] : memref<1x128xf32, #tpu.memory_space<vmem>>, vector<1x128xf32>
    %5 = vector.broadcast %4 : vector<1x128xf32> to vector<16x128xf32>
    %6 = arith.addf %3, %5 : vector<16x128xf32>
    %cst_5 = arith.constant 0.000000e+00 : f32
    %7 = vector.broadcast %cst_5 : f32 to vector<16x128xf32>
    %8 = arith.maximumf %6, %7 : vector<16x128xf32>
    %9 = arith.truncf %8 : vector<16x128xf32> to vector<16x128xbf16>
    %c0_6 = arith.constant 0 : index
    %c0_7 = arith.constant 0 : index
    %10 = vector.load %arg4[%c0_6, %c0_7] : memref<128x128xbf16, #tpu.memory_space<vmem>>, vector<128x128xbf16>
    %cst_8 = arith.constant dense<0.000000e+00> : vector<16x128xf32>
    %11 = tpu.matmul %9, %10, %cst_8 {dimension_numbers = #tpu.dot_dimension_numbers<[1], [0], [0], [1], [0, 0, 1, 1], [], []>} : vector<16x128xbf16>, vector<128x128xbf16>, vector<16x128xf32> -> vector<16x128xf32>
    %c0_9 = arith.constant 0 : index
    %c0_10 = arith.constant 0 : index
    %12 = vector.load %arg5[%c0_9, %c0_10] : memref<1x128xf32, #tpu.memory_space<vmem>>, vector<1x128xf32>
    %13 = vector.broadcast %12 : vector<1x128xf32> to vector<16x128xf32>
    %14 = arith.addf %11, %13 : vector<16x128xf32>
    %cst_11 = arith.constant 0.000000e+00 : f32
    %15 = vector.broadcast %cst_11 : f32 to vector<16x128xf32>
    %16 = arith.maximumf %14, %15 : vector<16x128xf32>
    %17 = arith.truncf %16 : vector<16x128xf32> to vector<16x128xbf16>
    %c0_12 = arith.constant 0 : index
    %c0_13 = arith.constant 0 : index
    %18 = vector.load %arg6[%c0_12, %c0_13] : memref<128x4xbf16, #tpu.memory_space<vmem>>, vector<128x4xbf16>
    %cst_14 = arith.constant dense<0.000000e+00> : vector<16x4xf32>
    %19 = tpu.matmul %17, %18, %cst_14 {dimension_numbers = #tpu.dot_dimension_numbers<[1], [0], [0], [1], [0, 0, 1, 1], [], []>} : vector<16x128xbf16>, vector<128x4xbf16>, vector<16x4xf32> -> vector<16x4xf32>
    %c0_15 = arith.constant 0 : index
    %c0_16 = arith.constant 0 : index
    %20 = vector.load %arg7[%c0_15, %c0_16] : memref<1x4xf32, #tpu.memory_space<vmem>>, vector<1x4xf32>
    %21 = vector.broadcast %20 : vector<1x4xf32> to vector<16x4xf32>
    %22 = arith.addf %19, %21 : vector<16x4xf32>
    %c0_17 = arith.constant 0 : index
    %c0_18 = arith.constant 0 : index
    %23 = vector.load %arg8[%c0_17, %c0_18] : memref<16x4xf32, #tpu.memory_space<vmem>>, vector<16x4xf32>
    tpu.vector_store %arg8[%c0_17, %c0_18], %22 {strides = array<i32>} : memref<16x4xf32, #tpu.memory_space<vmem>>, vector<16x4xf32>,
    return
  }
  func.func @transform_0(%arg0: i32) -> (i32, i32) {
    %c0_i32 = arith.constant 0 : i32
    %c0_i32_0 = arith.constant 0 : i32
    return %arg0, %c0_i32 : i32, i32
  }
  func.func @transform_1(%arg0: i32) -> (i32, i32) {
    %c0_i32 = arith.constant 0 : i32
    %c0_i32_0 = arith.constant 0 : i32
    %c0_i32_1 = arith.constant 0 : i32
    return %c0_i32, %c0_i32_0 : i32, i32
  }
  func.func @transform_2(%arg0: i32) -> (i32, i32) {
    %c0_i32 = arith.constant 0 : i32
    %c0_i32_0 = arith.constant 0 : i32
    %c0_i32_1 = arith.constant 0 : i32
    return %c0_i32, %c0_i32_0 : i32, i32
  }
  func.func @transform_3(%arg0: i32) -> (i32, i32) {
    %c0_i32 = arith.constant 0 : i32
    %c0_i32_0 = arith.constant 0 : i32
    %c0_i32_1 = arith.constant 0 : i32
    return %c0_i32, %c0_i32_0 : i32, i32
  }
  func.func @transform_4(%arg0: i32) -> (i32, i32) {
    %c0_i32 = arith.constant 0 : i32
    %c0_i32_0 = arith.constant 0 : i32
    %c0_i32_1 = arith.constant 0 : i32
    return %c0_i32, %c0_i32_0 : i32, i32
  }
  func.func @transform_5(%arg0: i32) -> (i32, i32) {
    %c0_i32 = arith.constant 0 : i32
    %c0_i32_0 = arith.constant 0 : i32
    %c0_i32_1 = arith.constant 0 : i32
    return %c0_i32, %c0_i32_0 : i32, i32
  }
  func.func @transform_6(%arg0: i32) -> (i32, i32) {
    %c0_i32 = arith.constant 0 : i32
    %c0_i32_0 = arith.constant 0 : i32
    %c0_i32_1 = arith.constant 0 : i32
    return %c0_i32, %c0_i32_0 : i32, i32
  }
  func.func @transform_7(%arg0: i32) -> (i32, i32) {
    %c0_i32 = arith.constant 0 : i32
    %c0_i32_0 = arith.constant 0 : i32
    return %arg0, %c0_i32 : i32, i32
  }
}

</mosaic_0001>

<llo_original>
// kernel: tpu_custom_call.1
$region0: #{tpu_custom_call.1}
  #allocation0 [shape = 'u32[]', space=smem, size = 0x4, offset = 0x4, fixed_abs, tag = 'smem constant byte address 0x4 - core index']
  #allocation1 [shape = 'u32[144,128]{1,0:T(1,128)}', space=vmem, size = 0x12000, scoped, tag = 'internal scratch']
  %s0 = inlined_call_operand.vmem [shape: f32[16,8], index: 0, kind: input, shape index: {}]
  %s1 = inlined_call_operand.vmem [shape: bf16[8,128], index: 1, kind: input, shape index: {}]
  %s2 = inlined_call_operand.vmem [shape: f32[1,128], index: 2, kind: input, shape index: {}]
  %s3 = inlined_call_operand.vmem [shape: bf16[128,128], index: 3, kind: input, shape index: {}]
  %s4 = inlined_call_operand.vmem [shape: f32[1,128], index: 4, kind: input, shape index: {}]
  %s5 = inlined_call_operand.vmem [shape: bf16[128,4], index: 5, kind: input, shape index: {}]
  %s6 = inlined_call_operand.vmem [shape: f32[1,4], index: 6, kind: input, shape index: {}]
  %s7 = inlined_call_operand.vmem [shape: f32[16,4], index: 7, kind: output, shape index: {}]
  %s8 = sld [smem:[#allocation0]]
  $region38: #{tpu_custom_call.1} parent=0
    _
  %s10 = ssub.s32 1, %s8
  %s11 = scalar_select 0, %s10, %s8
  // Predicated region
  $region2: #{tpu_custom_call.1} parent=0 // pred_check
    _
  $region3: #{tpu_custom_call.1} parent=0 // pred_check_branch
    %13 = sbr.rel (0) target = $region5
  $region4: #{tpu_custom_call.1} parent=0 // pred_region
    _
  $region5: #{tpu_custom_call.1} parent=0 // pred_fallthru
    _
  // Predicated region
  $region6: #{tpu_custom_call.1} parent=0 // pred_check
    _
  $region7: #{tpu_custom_call.1} parent=0 // pred_check_branch
    %15 = sbr.rel (0) target = $region9
  $region8: #{tpu_custom_call.1} parent=0 // pred_region
    _
  $region9: #{tpu_custom_call.1} parent=0 // pred_fallthru
    _
  // Predicated region
  $region10: #{tpu_custom_call.1} parent=0 // pred_check
    _
  $region11: #{tpu_custom_call.1} parent=0 // pred_check_branch
    %17 = sbr.rel (0) target = $region13
  $region12: #{tpu_custom_call.1} parent=0 // pred_region
    _
  $region13: #{tpu_custom_call.1} parent=0 // pred_fallthru
    _
  // Predicated region
  $region14: #{tpu_custom_call.1} parent=0 // pred_check
    _
  $region15: #{tpu_custom_call.1} parent=0 // pred_check_branch
    %19 = sbr.rel (0) target = $region17
  $region16: #{tpu_custom_call.1} parent=0 // pred_region
    _
  $region17: #{tpu_custom_call.1} parent=0 // pred_fallthru
    _
  // Predicated region
  $region18: #{tpu_custom_call.1} parent=0 // pred_check
    _
  $region19: #{tpu_custom_call.1} parent=0 // pred_check_branch
    %21 = sbr.rel (0) target = $region21
  $region20: #{tpu_custom_call.1} parent=0 // pred_region
    _
  $region21: #{tpu_custom_call.1} parent=0 // pred_fallthru
    _
  // Predicated region
  $region22: #{tpu_custom_call.1} parent=0 // pred_check
    _
  $region23: #{tpu_custom_call.1} parent=0 // pred_check_branch
    %23 = sbr.rel (0) target = $region25
  $region24: #{tpu_custom_call.1} parent=0 // pred_region
    _
  $region25: #{tpu_custom_call.1} parent=0 // pred_fallthru
    _
  // Predicated region
  $region26: #{tpu_custom_call.1} parent=0 // pred_check
    _
  $region27: #{tpu_custom_call.1} parent=0 // pred_check_branch
    %25 = sbr.rel (0) target = $region29
  $region28: #{tpu_custom_call.1} parent=0 // pred_region
    _
  $region29: #{tpu_custom_call.1} parent=0 // pred_fallthru
    _
  %v27 = vld [vmem:[%s0] sm:$0xff]
  %v28 = vld [vmem:[%s0 + $0x8] sm:$0xff]
  %v29 = vpack.c.bf16 %v28, %v27
  %v30 = vld [vmem:[%s1] sm:$0xf]
  %v31 = vld [vmem:[%s2] sm:$0x1]
  %v33 = vlaneseq
  %v34 = vshrl.u32 %v33, 7
  %v35 = vsub.s32 0, %v34
  %v36 = vrot.slane %v31, %v35
  %vm38 = vcmask 64512
  %v40 = vsel %vm38, %v29, 0
  %vm42 = vcmask 1043456
  %v44 = vsel %vm42, %v30, 0
  %46 = vmatprep.subr.bf16.mxu0 0
  %47 = vmatpush1.bf16.msra.mxu0 0
  %48 = vmatprep.subr.bf16.mxu0 0
  %49 = vmatpush1.bf16.msra.mxu0 0
  %50 = vmatprep.subr.bf16.mxu0 0
  %51 = vmatpush1.bf16.msra.mxu0 0
  %52 = vmatprep.subr.bf16.mxu0 0
  %53 = vmatpush1.bf16.msra.mxu0 0
  %54 = vmatprep.subr.bf16.mxu0 0
  %55 = vmatpush1.bf16.msra.mxu0 0
  %56 = vmatprep.subr.bf16.mxu0 0
  %57 = vmatpush1.bf16.msra.mxu0 0
  %58 = vmatprep.subr.bf16.mxu0 0
  %59 = vmatpush1.bf16.msra.mxu0 0
  %60 = vmatprep.subr.bf16.mxu0 0
  %61 = vmatpush1.bf16.msra.mxu0 %v44
  %62 = vmatprep.subr.bf16.mxu0 0
  %63 = vmatpush2.bf16.msra.mxu0 0
  %64 = vmatprep.subr.bf16.mxu0 0
  %65 = vmatpush2.bf16.msra.mxu0 0
  %66 = vmatprep.subr.bf16.mxu0 0
  %67 = vmatpush2.bf16.msra.mxu0 0
  %68 = vmatprep.subr.bf16.mxu0 0
  %69 = vmatpush2.bf16.msra.mxu0 0
  %70 = vmatprep.subr.bf16.mxu0 0
  %71 = vmatpush2.bf16.msra.mxu0 0
  %72 = vmatprep.subr.bf16.mxu0 0
  %73 = vmatpush2.bf16.msra.mxu0 0
  %74 = vmatprep.subr.bf16.mxu0 0
  %75 = vmatpush2.bf16.msra.mxu0 0
  %76 = vmatprep.subr.bf16.mxu0 0
  %77 = vmatpush2.bf16.msra.mxu0 0
  %78 = vmatprep.mubr.bf16.mxu0 0
  %79 = vmatmul.mubr.bf16.gmra.mxu0 %v40
  %v80 = vpop.f32.mrf.mxu0
  %v81 = vadd.f32 %v36, %v80
  %v82 = vpop.f32.mrf.mxu0
  %v83 = vpop.f32.mrf.mxu0
  %v84 = vadd.f32 %v36, %v83
  %v85 = vpop.f32.mrf.mxu0
  %86 = vdwg.mxu0
  %v87 = vmax.f32 %v81, 0.0
  %v88 = vmax.f32 %v84, 0.0
  %v89 = vpack.c.bf16 %v88, %v87
  %v90 = vld [vmem:[%s3] sm:$0xf]
  %v91 = vld [vmem:[%s3 + $0x4] sm:$0xf]
  %v92 = vld [vmem:[%s3 + $0x8] sm:$0xf]
  %v93 = vld [vmem:[%s3 + $0xc] sm:$0xf]
  %v94 = vld [vmem:[%s3 + $0x10] sm:$0xf]
  %v95 = vld [vmem:[%s3 + $0x14] sm:$0xf]
  %v96 = vld [vmem:[%s3 + $0x18] sm:$0xf]
  %v97 = vld [vmem:[%s3 + $0x1c] sm:$0xf]
  %v98 = vld [vmem:[%s3 + $0x20] sm:$0xf]
  %v99 = vld [vmem:[%s3 + $0x24] sm:$0xf]
  %v100 = vld [vmem:[%s3 + $0x28] sm:$0xf]
  %v101 = vld [vmem:[%s3 + $0x2c] sm:$0xf]
  %v102 = vld [vmem:[%s3 + $0x30] sm:$0xf]
  %v103 = vld [vmem:[%s3 + $0x34] sm:$0xf]
  %v104 = vld [vmem:[%s3 + $0x38] sm:$0xf]
  %v105 = vld [vmem:[%s3 + $0x3c] sm:$0xf]
  %v106 = vld [vmem:[%s4] sm:$0x1]
  %v108 = vlaneseq
  %v109 = vshrl.u32 %v108, 7
  %v110 = vsub.s32 0, %v109
  %v111 = vrot.slane %v106, %v110
  %v129 = vunpack.c.l.b16 %v90
  %v130 = vunpack.c.l.b16 %v91
  %v131 = vunpack.c.l.b16 %v92
  %v132 = vunpack.c.l.b16 %v93
  %v133 = vunpack.c.l.b16 %v94
  %v134 = vunpack.c.l.b16 %v95
  %v135 = vunpack.c.l.b16 %v96
  %v136 = vunpack.c.l.b16 %v97
  %v137 = vunpack.c.l.b16 %v98
  %v138 = vunpack.c.l.b16 %v99
  %v139 = vunpack.c.l.b16 %v100
  %v140 = vunpack.c.l.b16 %v101
  %v141 = vunpack.c.l.b16 %v102
  %v142 = vunpack.c.l.b16 %v103
  %v143 = vunpack.c.l.b16 %v104
  %v144 = vunpack.c.l.b16 %v105
  %v145 = vpack.c.b16 %v130, %v129
  %v146 = vpack.c.b16 %v132, %v131
  %v147 = vpack.c.b16 %v134, %v133
  %v148 = vpack.c.b16 %v136, %v135
  %v149 = vpack.c.b16 %v138, %v137
  %v150 = vpack.c.b16 %v140, %v139
  %v151 = vpack.c.b16 %v142, %v141
  %v152 = vpack.c.b16 %v144, %v143
  %161 = vmatprep.subr.bf16.mxu0 0
  %162 = vmatpush1.bf16.msra.mxu0 %v152
  %163 = vmatprep.subr.bf16.mxu0 0
  %164 = vmatpush1.bf16.msra.mxu0 %v151
  %165 = vmatprep.subr.bf16.mxu0 0
  %166 = vmatpush1.bf16.msra.mxu0 %v150
  %167 = vmatprep.subr.bf16.mxu0 0
  %168 = vmatpush1.bf16.msra.mxu0 %v149
  %169 = vmatprep.subr.bf16.mxu0 0
  %170 = vmatpush1.bf16.msra.mxu0 %v148
  %171 = vmatprep.subr.bf16.mxu0 0
  %172 = vmatpush1.bf16.msra.mxu0 %v147
  %173 = vmatprep.subr.bf16.mxu0 0
  %174 = vmatpush1.bf16.msra.mxu0 %v146
  %175 = vmatprep.subr.bf16.mxu0 0
  %176 = vmatpush1.bf16.msra.mxu0 %v145
  %177 = vmatprep.subr.bf16.mxu0 0
  %178 = vmatpush2.bf16.msra.mxu0 0
  %179 = vmatprep.subr.bf16.mxu0 0
  %180 = vmatpush2.bf16.msra.mxu0 0
  %181 = vmatprep.subr.bf16.mxu0 0
  %182 = vmatpush2.bf16.msra.mxu0 0
  %183 = vmatprep.subr.bf16.mxu0 0
  %184 = vmatpush2.bf16.msra.mxu0 0
  %185 = vmatprep.subr.bf16.mxu0 0
  %186 = vmatpush2.bf16.msra.mxu0 0
  %187 = vmatprep.subr.bf16.mxu0 0
  %188 = vmatpush2.bf16.msra.mxu0 0
  %189 = vmatprep.subr.bf16.mxu0 0
  %190 = vmatpush2.bf16.msra.mxu0 0
  %191 = vmatprep.subr.bf16.mxu0 0
  %192 = vmatpush2.bf16.msra.mxu0 0
  %193 = vmatprep.mubr.bf16.mxu0 0
  %194 = vmatmul.mubr.bf16.gmra.mxu0 %v89
  %v195 = vpop.f32.mrf.mxu0
  %v196 = vadd.f32 %v111, %v195
  %v197 = vpop.f32.mrf.mxu0
  %v198 = vpop.f32.mrf.mxu0
  %v199 = vadd.f32 %v111, %v198
  %v200 = vpop.f32.mrf.mxu0
  %201 = vdwg.mxu0
  %v202 = vmax.f32 %v196, 0.0
  %v203 = vmax.f32 %v199, 0.0
  %v204 = vpack.c.bf16 %v203, %v202
  %v205 = vld [vmem:[%s5] sm:$0xf]
  %v206 = vld [vmem:[%s5 + $0x4] sm:$0xf]
  %v207 = vld [vmem:[%s5 + $0x8] sm:$0xf]
  %v208 = vld [vmem:[%s5 + $0xc] sm:$0xf]
  %v209 = vld [vmem:[%s5 + $0x10] sm:$0xf]
  %v210 = vld [vmem:[%s5 + $0x14] sm:$0xf]
  %v211 = vld [vmem:[%s5 + $0x18] sm:$0xf]
  %v212 = vld [vmem:[%s5 + $0x1c] sm:$0xf]
  %v213 = vld [vmem:[%s5 + $0x20] sm:$0xf]
  %v214 = vld [vmem:[%s5 + $0x24] sm:$0xf]
  %v215 = vld [vmem:[%s5 + $0x28] sm:$0xf]
  %v216 = vld [vmem:[%s5 + $0x2c] sm:$0xf]
  %v217 = vld [vmem:[%s5 + $0x30] sm:$0xf]
  %v218 = vld [vmem:[%s5 + $0x34] sm:$0xf]
  %v219 = vld [vmem:[%s5 + $0x38] sm:$0xf]
  %v220 = vld [vmem:[%s5 + $0x3c] sm:$0xf]
  %v221 = vld [vmem:[%s6] sm:$0x1]
  %v223 = vlaneseq
  %v224 = vshrl.u32 %v223, 7
  %v225 = vsub.s32 0, %v224
  %v226 = vrot.slane %v221, %v225
  %v244 = vunpack.c.l.b16 %v205
  %v245 = vunpack.c.l.b16 %v206
  %v246 = vunpack.c.l.b16 %v207
  %v247 = vunpack.c.l.b16 %v208
  %v248 = vunpack.c.l.b16 %v209
  %v249 = vunpack.c.l.b16 %v210
  %v250 = vunpack.c.l.b16 %v211
  %v251 = vunpack.c.l.b16 %v212
  %v252 = vunpack.c.l.b16 %v213
  %v253 = vunpack.c.l.b16 %v214
  %v254 = vunpack.c.l.b16 %v215
  %v255 = vunpack.c.l.b16 %v216
  %v256 = vunpack.c.l.b16 %v217
  %v257 = vunpack.c.l.b16 %v218
  %v258 = vunpack.c.l.b16 %v219
  %v259 = vunpack.c.l.b16 %v220
  %v260 = vpack.c.b16 %v245, %v244
  %v261 = vpack.c.b16 %v247, %v246
  %v262 = vpack.c.b16 %v249, %v248
  %v263 = vpack.c.b16 %v251, %v250
  %v264 = vpack.c.b16 %v253, %v252
  %v265 = vpack.c.b16 %v255, %v254
  %v266 = vpack.c.b16 %v257, %v256
  %v267 = vpack.c.b16 %v259, %v258
  %276 = vmatprep.subr.bf16.mxu0 0
  %277 = vmatpush1.bf16.msra.mxu0 %v267
  %278 = vmatprep.subr.bf16.mxu0 0
  %279 = vmatpush1.bf16.msra.mxu0 %v266
  %280 = vmatprep.subr.bf16.mxu0 0
  %281 = vmatpush1.bf16.msra.mxu0 %v265
  %282 = vmatprep.subr.bf16.mxu0 0
  %283 = vmatpush1.bf16.msra.mxu0 %v264
  %284 = vmatprep.subr.bf16.mxu0 0
  %285 = vmatpush1.bf16.msra.mxu0 %v263
  %286 = vmatprep.subr.bf16.mxu0 0
  %287 = vmatpush1.bf16.msra.mxu0 %v262
  %288 = vmatprep.subr.bf16.mxu0 0
  %289 = vmatpush1.bf16.msra.mxu0 %v261
  %290 = vmatprep.subr.bf16.mxu0 0
  %291 = vmatpush1.bf16.msra.mxu0 %v260
  %292 = vmatprep.subr.bf16.mxu0 0
  %293 = vmatpush2.bf16.msra.mxu0 0
  %294 = vmatprep.subr.bf16.mxu0 0
  %295 = vmatpush2.bf16.msra.mxu0 0
  %296 = vmatprep.subr.bf16.mxu0 0
  %297 = vmatpush2.bf16.msra.mxu0 0
  %298 = vmatprep.subr.bf16.mxu0 0
  %299 = vmatpush2.bf16.msra.mxu0 0
  %300 = vmatprep.subr.bf16.mxu0 0
  %301 = vmatpush2.bf16.msra.mxu0 0
  %302 = vmatprep.subr.bf16.mxu0 0
  %303 = vmatpush2.bf16.msra.mxu0 0
  %304 = vmatprep.subr.bf16.mxu0 0
  %305 = vmatpush2.bf16.msra.mxu0 0
  %306 = vmatprep.subr.bf16.mxu0 0
  %307 = vmatpush2.bf16.msra.mxu0 0
  %308 = vmatprep.mubr.bf16.mxu0 0
  %309 = vmatmul.mubr.bf16.gmra.mxu0 %v204
  %v310 = vpop.f32.mrf.mxu0
  %v311 = vadd.f32 %v226, %v310
  %v312 = vpop.f32.mrf.mxu0
  %v313 = vpop.f32.mrf.mxu0
  %v314 = vadd.f32 %v226, %v313
  %v315 = vpop.f32.mrf.mxu0
  %316 = vdwg.mxu0
  %vm317 = vcmask 31744
  %318 = vst.msk [vmem:[%s7] sm:$0xff] %vm317, %v311
  %319 = vst.msk [vmem:[%s7 + $0x8] sm:$0xff] %vm317, %v314
  // Predicated region
  $region30: #{tpu_custom_call.1} parent=0 // pred_check
    _
  $region31: #{tpu_custom_call.1} parent=0 // pred_check_branch
    %321 = sbr.rel (0) target = $region33
  $region32: #{tpu_custom_call.1} parent=0 // pred_region
    _
  $region33: #{tpu_custom_call.1} parent=0 // pred_fallthru
    _
  // Predicated region
  $region34: #{tpu_custom_call.1} parent=0 // pred_check
    _
  $region35: #{tpu_custom_call.1} parent=0 // pred_check_branch
    %323 = sbr.rel (0) target = $region37
  $region36: #{tpu_custom_call.1} parent=0 // pred_region
    _
  $region37: #{tpu_custom_call.1} parent=0 // pred_fallthru
    _

</llo_original>
